<compile_context>
chip_gen: v6e
topology: v6e:2x2x1
jax: 0.10.0
libtpu: 0.0.40
codegen_flags: <defaults>
</compile_context>

<pallas_src>
import functools
import math

import jax
import jax.numpy as jnp
from jax.experimental import pallas as pl
from jax.experimental.pallas import tpu as pltpu


# ------------------------------ fused kernel --------------------------------

def _conv_gap_kernel(x_ref, amap_ref, w_ref, brow_ref, o_ref, *,
                     B, R, Wp, C, NW, inv_hw):
    """One (image-batch, row-chunk) grid step.

    x_ref    : [B, Hp, Wp*C]  uint8  raw padded images, lane-dense (resident across chunks)
    amap_ref : [Hp, Wp*C]     f32    additive normalize map (-255*mean_c interior, 0 on halo)
    w_ref    : [3, Wp*C, NW]  bf16   banded conv weights (scale folded in), one slab per row tap
    brow_ref : [1, NW]        f32    bias tiled across the q (output-column) groups
    o_ref    : [B, 1, NW]     f32    running GAP accumulator (resident across chunks)
    """
    r = pl.program_id(1)

    @pl.when(r == 0)
    def _init():
        o_ref[...] = jnp.zeros_like(o_ref)

    WpC = Wp * C
    row0 = pl.multiple_of(r * R, R)

    # Fused ToTensor + Normalize (constants hoisted): one add + bf16 cast on a
    # lane-dense [B, R+2, Wp*C] chunk.  Scale is folded into the weights.
    x = x_ref[:, pl.ds(row0, R + 2), :].astype(jnp.float32)
    a = amap_ref[pl.ds(row0, R + 2), :]
    xn = (x + a[None, :, :]).astype(jnp.bfloat16)

    # 3x3 conv as 3 MXU matmuls (one per vertical tap).  Horizontal taps and
    # input channels are folded into the banded RHS (K = Wp*C, N = W*Cout_p),
    # so no im2col / minor-dim relayout is needed in-kernel.
    m = B * R
    lhs0 = xn[:, 0:R, :].reshape(m, WpC)
    lhs1 = xn[:, 1:R + 1, :].reshape(m, WpC)
    lhs2 = xn[:, 2:R + 2, :].reshape(m, WpC)
    acc = (jnp.dot(lhs0, w_ref[0], preferred_element_type=jnp.float32)
           + jnp.dot(lhs1, w_ref[1], preferred_element_type=jnp.float32)
           + jnp.dot(lhs2, w_ref[2], preferred_element_type=jnp.float32))

    y = jnp.maximum(acc + brow_ref[...], 0.0)          # bias + ReLU, [m, NW]

    # Running global-average-pool accumulation over this chunk's rows, per image.
    for b in range(B):                                 # B is small and static
        seg = y[b * R:(b + 1) * R, :]
        o_ref[b, :, :] += seg.sum(axis=0, keepdims=True) * inv_hw


# --------------------------- forward-pass wrapper ----------------------------

def _rows_per_chunk(H):
    if H <= 32:
        return H
    for r in (32, 16, 8, 4):
        if H % r == 0:
            return r
    return H


def custom_feature_extractor_forward(xs_u8, conv_w, conv_b, mean, std,
                                     *, images_per_step=4):
    """xs_u8: [N, H, W, C] uint8 (the stacked, pre-resized/cropped images)."""
    N, H, W, C = xs_u8.shape
    Cout = conv_w.shape[0]
    Hp, Wp = H + 2, W + 2

    # Pad Cout so the matmul N dim (W * Cout_p) is a multiple of 128
    # (lane-dense output stores, clean MXU N tiles).
    need = 128 // math.gcd(W, 128)
    Cout_p = ((Cout + need - 1) // need) * need
    NW = W * Cout_p

    B_img = max(1, min(N, images_per_step))
    N_pad = ((N + B_img - 1) // B_img) * B_img
    R = _rows_per_chunk(H)
    n_chunks = H // R

    # ---- host-side, one-time input prep (cheap, tiny arrays) ----------------
    # Zero-pad by 1 px (conv halo), pad N to a multiple of B_img, and flatten to
    # the lane-dense [N_pad, Hp, Wp*C] layout (same HBM bytes, dense VMEM tiles).
    xp = jnp.pad(xs_u8, ((0, N_pad - N), (1, 1), (1, 1), (0, 0)))
    x2d = xp.reshape(N_pad, Hp, Wp * C)

    mean_f = mean.astype(jnp.float32)
    std_f = std.astype(jnp.float32)
    scale_c = 1.0 / (255.0 * std_f)                    # folded into the weights

    # Additive normalize map: x_norm = (x + amap) * scale; zero on the halo so
    # the conv sees exact zero padding (PyTorch zero-pads after Normalize).
    ii = jnp.arange(Hp)[:, None, None]
    jj = jnp.arange(Wp)[None, :, None]
    interior = (ii >= 1) & (ii <= H) & (jj >= 1) & (jj <= W)
    amap = jnp.where(interior, (-255.0 * mean_f)[None, None, :], 0.0)
    amap = amap.reshape(Hp, Wp * C).astype(jnp.float32)

    # Banded conv weights:
    #   RHS_di[jp*C + c, q*Cout_p + co] = conv_w[co, c, di, jp - q] * scale_c
    # for jp - q in {0, 1, 2}, else 0.  Built in f32, cast to bf16 once.
    w_s = conv_w.astype(jnp.float32) * scale_c[None, :, None, None]   # [Cout,C,3,3]
    wt = jnp.transpose(w_s, (2, 3, 1, 0))                             # [di,dj,C,Cout]
    wt = jnp.pad(wt, ((0, 0), (0, 0), (0, 0), (0, Cout_p - Cout)))    # [3,3,C,Cout_p]
    jp_i = jnp.arange(Wp)[:, None]
    q_i = jnp.arange(W)[None, :]
    dj = jp_i - q_i                                                   # [Wp, W]
    valid = ((dj >= 0) & (dj <= 2)).astype(jnp.float32)[:, :, None, None]
    djc = jnp.clip(dj, 0, 2)
    rhs = []
    for di in range(3):
        blk = wt[di][djc] * valid                                     # [Wp, W, C, Cout_p]
        rhs.append(jnp.transpose(blk, (0, 2, 1, 3)).reshape(Wp * C, NW))
    rhs = jnp.stack(rhs, axis=0).astype(jnp.bfloat16)                 # [3, Wp*C, NW]

    brow = jnp.tile(jnp.pad(conv_b.astype(jnp.float32), (0, Cout_p - Cout)),
                    (W,)).reshape(1, NW)

    kernel = functools.partial(_conv_gap_kernel, B=B_img, R=R, Wp=Wp, C=C,
                               NW=NW, inv_hw=1.0 / (H * W))

    out = pl.pallas_call(
        kernel,
        out_shape=jax.ShapeDtypeStruct((N_pad, 1, NW), jnp.float32),
        grid=(N_pad // B_img, n_chunks),
        in_specs=[
            pl.BlockSpec((B_img, Hp, Wp * C), lambda n, r: (n, 0, 0)),  # images (resident across r)
            pl.BlockSpec((Hp, Wp * C), lambda n, r: (0, 0)),            # additive map (resident)
            pl.BlockSpec((3, Wp * C, NW), lambda n, r: (0, 0, 0)),      # banded weights (resident)
            pl.BlockSpec((1, NW), lambda n, r: (0, 0)),                 # tiled bias (resident)
        ],
        out_specs=pl.BlockSpec((B_img, 1, NW), lambda n, r: (n, 0, 0)),
        compiler_params=pltpu.CompilerParams(
            dimension_semantics=("parallel", "arbitrary"),
            vmem_limit_bytes=32 * 1024 * 1024,
        ),
    )(x2d, amap, rhs, brow)

    # Finish the GAP: rows were already summed (and scaled by 1/(H*W)) in-kernel;
    # sum the W column groups on this tiny array, drop Cout padding, NCHW shape.
    pooled = out[:N, 0, :].reshape(N, W, Cout_p)[:, :, :Cout].sum(axis=1)
    return pooled.reshape(N, Cout, 1, 1)


# --------------------------- pure-JAX reference ------------------------------

def _reference(xs_u8, conv_w, conv_b, mean, std):
    N, H, W, C = xs_u8.shape
    x = xs_u8.astype(jnp.float32) / 255.0
    x = (x - mean[None, None, None, :]) / std[None, None, None, :]
    xp = jnp.pad(x, ((0, 0), (1, 1), (1, 1), (0, 0)))
    y = jnp.zeros((N, H, W, conv_w.shape[0]), jnp.float32)
    for di in range(3):
        for dj in range(3):
            y = y + jnp.einsum('nhwc,oc->nhwo',
                               xp[:, di:di + H, dj:dj + W, :],
                               conv_w[:, :, di, dj])
    y = jnp.maximum(y + conv_b[None, None, None, :], 0.0)
    return jnp.mean(y, axis=(1, 2)).reshape(N, -1, 1, 1)


# ----------------------------------- main ------------------------------------

if __name__ == "__main__":
    key = jax.random.PRNGKey(0)
    k_img, k_w, k_b = jax.random.split(key, 3)

    N, H, W, C = 2, 16, 16, 3
    Cout = 32

    # synthetic uint8 images (as would be handed to the transform)
    xs = jax.random.randint(k_img, (N, H, W, C), 0, 256, dtype=jnp.int32)
    xs = xs.astype(jnp.uint8)

    # deterministic synthetic "backbone" parameters (conv3x3 C->Cout)
    conv_w = 0.05 * jax.random.normal(k_w, (Cout, C, 3, 3), dtype=jnp.float32)
    conv_b = 0.01 * jax.random.normal(k_b, (Cout,), dtype=jnp.float32)

    # ImageNet-style normalization constants (benNet branch of the module)
    mean = jnp.array([0.485, 0.456, 0.406], dtype=jnp.float32)
    std = jnp.array([0.229, 0.224, 0.225], dtype=jnp.float32)

    fwd = jax.jit(custom_feature_extractor_forward)
    y = jax.block_until_ready(fwd(xs, conv_w, conv_b, mean, std))

    assert y.shape == (N, Cout, 1, 1) and y.dtype == jnp.float32
    assert bool(jnp.all(jnp.isfinite(y)))

    y_ref = _reference(xs, conv_w, conv_b, mean, std)
    err = float(jnp.max(jnp.abs(y - y_ref)))
    assert err < 5e-2, f"max abs error vs reference: {err}"

    print("KERNEL_OK")
</pallas_src>

<mosaic_0001>
module attributes {stable_mosaic.version = 11 : i64} {
  func.func @_conv_gap_kernel(%arg0: i32, %arg1: i32, %arg2: memref<2x18x54xi8, #tpu.memory_space<vmem>>, %arg3: memref<18x54xf32, #tpu.memory_space<vmem>>, %arg4: memref<3x54x512xbf16, #tpu.memory_space<vmem>>, %arg5: memref<1x512xf32, #tpu.memory_space<vmem>>, %arg6: memref<2x1x512xf32, #tpu.memory_space<vmem>>) attributes {dimension_semantics = [#tpu.dimension_semantics<parallel>, #tpu.dimension_semantics<arbitrary>], iteration_bounds = array<i64: 1, 1>, scalar_prefetch = 0 : i64, scratch_operands = 0 : i64, tpu.core_type = #tpu.core_type<tc>, window_params = [{transform_indices = @transform_0, window_bounds = array<i64: 2, 18, 54>}, {pipeline_mode = #tpu.pipeline_mode<synchronous>, transform_indices = @transform_1, window_bounds = array<i64: 18, 54>}, {pipeline_mode = #tpu.pipeline_mode<synchronous>, transform_indices = @transform_2, window_bounds = array<i64: 3, 54, 512>}, {pipeline_mode = #tpu.pipeline_mode<synchronous>, transform_indices = @transform_3, window_bounds = array<i64: 1, 512>}, {transform_indices = @transform_4, window_bounds = array<i64: 2, 1, 512>}]} {
    %c0_i32 = arith.constant 0 : i32
    %0 = arith.cmpi eq, %arg1, %c0_i32 : i32
    %1 = arith.extui %0 : i1 to i32
    %c0_i32_0 = arith.constant 0 : i32
    %2 = arith.cmpi ne, %1, %c0_i32_0 : i32
    scf.if %2 {
      %cst_31 = arith.constant 0.000000e+00 : f32
      %58 = vector.broadcast %cst_31 : f32 to vector<2x1x512xf32>
      %c0_32 = arith.constant 0 : index
      %c0_33 = arith.constant 0 : index
      %c0_34 = arith.constant 0 : index
      %59 = vector.load %arg6[%c0_32, %c0_33, %c0_34] : memref<2x1x512xf32, #tpu.memory_space<vmem>>, vector<2x1x512xf32>
      tpu.vector_store %arg6[%c0_32, %c0_33, %c0_34], %58 {strides = array<i32>} : memref<2x1x512xf32, #tpu.memory_space<vmem>>, vector<2x1x512xf32>,
    } else {
    }
    %c16_i32 = arith.constant 16 : i32
    %3 = arith.muli %arg1, %c16_i32 : i32
    %4 = tpu.assume_multiple %3, 16 : i32
    %c0 = arith.constant 0 : index
    %5 = arith.index_cast %4 : i32 to index
    %c0_1 = arith.constant 0 : index
    %6 = vector.load %arg2[%c0, %5, %c0_1] : memref<2x18x54xi8, #tpu.memory_space<vmem>>, vector<2x18x54xi8>
    %7 = arith.uitofp %6 : vector<2x18x54xi8> to vector<2x18x54xf32>
    %8 = arith.index_cast %4 : i32 to index
    %c0_2 = arith.constant 0 : index
    %9 = vector.load %arg3[%8, %c0_2] : memref<18x54xf32, #tpu.memory_space<vmem>>, vector<18x54xf32>
    %10 = vector.shape_cast %9 : vector<18x54xf32> to vector<1x18x54xf32>
    %11 = vector.broadcast %10 : vector<1x18x54xf32> to vector<2x18x54xf32>
    %12 = arith.addf %7, %11 : vector<2x18x54xf32>
    %13 = arith.truncf %12 : vector<2x18x54xf32> to vector<2x18x54xbf16>
    %14 = vector.extract_strided_slice %13 {offsets = [0, 0, 0], sizes = [2, 16, 54], strides = [1, 1, 1]} : vector<2x18x54xbf16> to vector<2x16x54xbf16>
    %15 = vector.shape_cast %14 : vector<2x16x54xbf16> to vector<32x54xbf16>
    %16 = vector.extract_strided_slice %13 {offsets = [0, 1, 0], sizes = [2, 16, 54], strides = [1, 1, 1]} : vector<2x18x54xbf16> to vector<2x16x54xbf16>
    %17 = vector.shape_cast %16 : vector<2x16x54xbf16> to vector<32x54xbf16>
    %18 = vector.extract_strided_slice %13 {offsets = [0, 2, 0], sizes = [2, 16, 54], strides = [1, 1, 1]} : vector<2x18x54xbf16> to vector<2x16x54xbf16>
    %19 = vector.shape_cast %18 : vector<2x16x54xbf16> to vector<32x54xbf16>
    %c0_3 = arith.constant 0 : index
    %c0_4 = arith.constant 0 : index
    %c0_5 = arith.constant 0 : index
    %20 = vector.load %arg4[%c0_3, %c0_4, %c0_5] : memref<3x54x512xbf16, #tpu.memory_space<vmem>>, vector<1x54x512xbf16>
    %21 = vector.shape_cast %20 : vector<1x54x512xbf16> to vector<54x512xbf16>
    %cst = arith.constant dense<0.000000e+00> : vector<32x512xf32>
    %22 = tpu.matmul %15, %21, %cst {dimension_numbers = #tpu.dot_dimension_numbers<[1], [0], [0], [1], [0, 0, 1, 1], [], []>} : vector<32x54xbf16>, vector<54x512xbf16>, vector<32x512xf32> -> vector<32x512xf32>
    %c1 = arith.constant 1 : index
    %c0_6 = arith.constant 0 : index
    %c0_7 = arith.constant 0 : index
    %23 = vector.load %arg4[%c1, %c0_6, %c0_7] : memref<3x54x512xbf16, #tpu.memory_space<vmem>>, vector<1x54x512xbf16>
    %24 = vector.shape_cast %23 : vector<1x54x512xbf16> to vector<54x512xbf16>
    %cst_8 = arith.constant dense<0.000000e+00> : vector<32x512xf32>
    %25 = tpu.matmul %17, %24, %cst_8 {dimension_numbers = #tpu.dot_dimension_numbers<[1], [0], [0], [1], [0, 0, 1, 1], [], []>} : vector<32x54xbf16>, vector<54x512xbf16>, vector<32x512xf32> -> vector<32x512xf32>
    %26 = arith.addf %22, %25 : vector<32x512xf32>
    %c2 = arith.constant 2 : index
    %c0_9 = arith.constant 0 : index
    %c0_10 = arith.constant 0 : index
    %27 = vector.load %arg4[%c2, %c0_9, %c0_10] : memref<3x54x512xbf16, #tpu.memory_space<vmem>>, vector<1x54x512xbf16>
    %28 = vector.shape_cast %27 : vector<1x54x512xbf16> to vector<54x512xbf16>
    %cst_11 = arith.constant dense<0.000000e+00> : vector<32x512xf32>
    %29 = tpu.matmul %19, %28, %cst_11 {dimension_numbers = #tpu.dot_dimension_numbers<[1], [0], [0], [1], [0, 0, 1, 1], [], []>} : vector<32x54xbf16>, vector<54x512xbf16>, vector<32x512xf32> -> vector<32x512xf32>
    %30 = arith.addf %26, %29 : vector<32x512xf32>
    %c0_12 = arith.constant 0 : index
    %c0_13 = arith.constant 0 : index
    %31 = vector.load %arg5[%c0_12, %c0_13] : memref<1x512xf32, #tpu.memory_space<vmem>>, vector<1x512xf32>
    %32 = vector.broadcast %31 : vector<1x512xf32> to vector<32x512xf32>
    %33 = arith.addf %30, %32 : vector<32x512xf32>
    %cst_14 = arith.constant 0.000000e+00 : f32
    %34 = vector.broadcast %cst_14 : f32 to vector<32x512xf32>
    %35 = arith.maximumf %33, %34 : vector<32x512xf32>
    %36 = vector.extract_strided_slice %35 {offsets = [0, 0], sizes = [16, 512], strides = [1, 1]} : vector<32x512xf32> to vector<16x512xf32>
    %c0_15 = arith.constant 0 : index
    %c0_16 = arith.constant 0 : index
    %c0_17 = arith.constant 0 : index
    %37 = vector.load %arg6[%c0_15, %c0_16, %c0_17] : memref<2x1x512xf32, #tpu.memory_space<vmem>>, vector<1x1x512xf32>
    %38 = vector.shape_cast %37 : vector<1x1x512xf32> to vector<1x512xf32>
    %cst_18 = arith.constant dense<0.000000e+00> : vector<512xf32>
    %39 = vector.multi_reduction <add>, %36, %cst_18 [0] : vector<16x512xf32> to vector<512xf32>
    %40 = vector.shape_cast %39 : vector<512xf32> to vector<1x512xf32>
    %cst_19 = arith.constant 3.906250e-03 : f32
    %41 = vector.broadcast %cst_19 : f32 to vector<1x512xf32>
    %42 = arith.mulf %40, %41 : vector<1x512xf32>
    %43 = arith.addf %38, %42 : vector<1x512xf32>
    %c0_20 = arith.constant 0 : index
    %c0_21 = arith.constant 0 : index
    %c0_22 = arith.constant 0 : index
    %44 = vector.load %arg6[%c0_20, %c0_21, %c0_22] : memref<2x1x512xf32, #tpu.memory_space<vmem>>, vector<1x1x512xf32>
    %45 = vector.shape_cast %44 : vector<1x1x512xf32> to vector<1x512xf32>
    %46 = vector.shape_cast %43 : vector<1x512xf32> to vector<1x1x512xf32>
    tpu.vector_store %arg6[%c0_20, %c0_21, %c0_22], %46 {strides = array<i32>} : memref<2x1x512xf32, #tpu.memory_space<vmem>>, vector<1x1x512xf32>,
    %47 = vector.extract_strided_slice %35 {offsets = [16, 0], sizes = [16, 512], strides = [1, 1]} : vector<32x512xf32> to vector<16x512xf32>
    %c1_23 = arith.constant 1 : index
    %c0_24 = arith.constant 0 : index
    %c0_25 = arith.constant 0 : index
    %48 = vector.load %arg6[%c1_23, %c0_24, %c0_25] : memref<2x1x512xf32, #tpu.memory_space<vmem>>, vector<1x1x512xf32>
    %49 = vector.shape_cast %48 : vector<1x1x512xf32> to vector<1x512xf32>
    %cst_26 = arith.constant dense<0.000000e+00> : vector<512xf32>
    %50 = vector.multi_reduction <add>, %47, %cst_26 [0] : vector<16x512xf32> to vector<512xf32>
    %51 = vector.shape_cast %50 : vector<512xf32> to vector<1x512xf32>
    %cst_27 = arith.constant 3.906250e-03 : f32
    %52 = vector.broadcast %cst_27 : f32 to vector<1x512xf32>
    %53 = arith.mulf %51, %52 : vector<1x512xf32>
    %54 = arith.addf %49, %53 : vector<1x512xf32>
    %c1_28 = arith.constant 1 : index
    %c0_29 = arith.constant 0 : index
    %c0_30 = arith.constant 0 : index
    %55 = vector.load %arg6[%c1_28, %c0_29, %c0_30] : memref<2x1x512xf32, #tpu.memory_space<vmem>>, vector<1x1x512xf32>
    %56 = vector.shape_cast %55 : vector<1x1x512xf32> to vector<1x512xf32>
    %57 = vector.shape_cast %54 : vector<1x512xf32> to vector<1x1x512xf32>
    tpu.vector_store %arg6[%c1_28, %c0_29, %c0_30], %57 {strides = array<i32>} : memref<2x1x512xf32, #tpu.memory_space<vmem>>, vector<1x1x512xf32>,
    return
  }
  func.func @transform_0(%arg0: i32, %arg1: i32) -> (i32, i32, i32) {
    %c0_i32 = arith.constant 0 : i32
    %c0_i32_0 = arith.constant 0 : i32
    %c0_i32_1 = arith.constant 0 : i32
    return %arg0, %c0_i32, %c0_i32_0 : i32, i32, i32
  }
  func.func @transform_1(%arg0: i32, %arg1: i32) -> (i32, i32) {
    %c0_i32 = arith.constant 0 : i32
    %c0_i32_0 = arith.constant 0 : i32
    %c0_i32_1 = arith.constant 0 : i32
    return %c0_i32, %c0_i32_0 : i32, i32
  }
  func.func @transform_2(%arg0: i32, %arg1: i32) -> (i32, i32, i32) {
    %c0_i32 = arith.constant 0 : i32
    %c0_i32_0 = arith.constant 0 : i32
    %c0_i32_1 = arith.constant 0 : i32
    %c0_i32_2 = arith.constant 0 : i32
    return %c0_i32, %c0_i32_0, %c0_i32_1 : i32, i32, i32
  }
  func.func @transform_3(%arg0: i32, %arg1: i32) -> (i32, i32) {
    %c0_i32 = arith.constant 0 : i32
    %c0_i32_0 = arith.constant 0 : i32
    %c0_i32_1 = arith.constant 0 : i32
    return %c0_i32, %c0_i32_0 : i32, i32
  }
  func.func @transform_4(%arg0: i32, %arg1: i32) -> (i32, i32, i32) {
    %c0_i32 = arith.constant 0 : i32
    %c0_i32_0 = arith.constant 0 : i32
    %c0_i32_1 = arith.constant 0 : i32
    return %arg0, %c0_i32, %c0_i32_0 : i32, i32, i32
  }
}

</mosaic_0001>

<llo_original>
// kernel: tile.8
$region0: #{tile.8}
  #allocation0 [shape = 's32[1]{0}', space=sflag, size = 0x4, scoped, tag = 'scoped memory for tile.8']
  %s0 = inlined_call_operand.vmem [shape: f32[32], index: 0, kind: input, shape index: {}]
  %s1 = inlined_call_operand.vmem [shape: f32[16,32], index: 1, kind: output, shape index: {}]
  // Predicated region
  $region2: #{tile.8} parent=0 // pred_check
    _
  $region3: #{tile.8} parent=0 // pred_check_branch
    %3 = sbr.rel (0) target = $region5
  $region4: #{tile.8} parent=0 // pred_region
    _
  $region5: #{tile.8} parent=0 // pred_fallthru
    _
  %v4 = vld [vmem:[%s0] ss:$0 sm:$0xff]
  %5 = vst [vmem:[%s1] sm:$0xff] %v4
  %s6 = scalar_lea.vmem %s1, 8
  %7 = vst [vmem:[%s6] sm:$0xff] %v4

// kernel: tile.9
$region0: #{tile.9}
  %s0 = inlined_call_operand.vmem [shape: f32[16,32], index: 0, kind: input, shape index: {}]
  %s1 = inlined_call_operand.vmem [shape: f32[1,512], index: 1, kind: output, shape index: {}]
  $region1: #{tile.9} parent=0
    #allocation0 [shape = 'u8[16384]{0}', space=vmem, size = 0x4000, scoped, tag = 'scoped mem for output reshape']
    %v2 = vld [vmem:[%s0] ss:$4 sm:$0xf]
    %vm3 = vcmask 261120
    %4 = vst.msk [vmem:[#allocation0] ss:$8 sm:$0xf] %vm3, %v2
    %s5 = scalar_lea.vmem %s0, 3
    %v6 = vld [vmem:[%s5] ss:$4 sm:$0xf]
    %7 = vrot.lane.b32.xlu0 %v6, 96
    %v8 = vpop.permute.xlu0 %7
    %vm9 = vcmask 1048320
    %10 = vst.msk [vmem:[#allocation0] ss:$8 sm:$0xf] %vm9, %v8
    %s11 = scalar_lea.vmem %s0, 2
    %v12 = vld [vmem:[%s11] ss:$4 sm:$0xf]
    %13 = vrot.lane.b32.xlu0 %v12, 64
    %v14 = vpop.permute.xlu0 %13
    %vm15 = vcmask 785920
    %16 = vst.msk [vmem:[#allocation0] ss:$8 sm:$0xf] %vm15, %v14
    %s17 = scalar_lea.vmem %s0, 1
    %v18 = vld [vmem:[%s17] ss:$4 sm:$0xf]
    %19 = vrot.lane.b32.xlu0 %v18, 32
    %v20 = vpop.permute.xlu0 %19
    %vm21 = vcmask 523520
    %22 = vst.msk [vmem:[#allocation0] ss:$8 sm:$0xf] %vm21, %v20
    %s24 = sshll.u32 1, 1
    %s25 = ssub.s32 %s24, 1
    %v27 = vld [vmem:[#allocation0] sm:%s25]
    %s28 = sshll.u32 1, 1
    %s29 = ssub.s32 %s28, 1
    %30 = vst [vmem:[%s1] sm:%s29] %v27
    %s31 = scalar_lea.vmem [#allocation0], 8
    %v32 = vld [vmem:[%s31] sm:%s25]
    %s33 = sshll.u32 1, 1
    %s34 = ssub.s32 %s33, 1
    %s35 = scalar_lea.vmem %s1, 1
    %36 = vst [vmem:[%s35] sm:%s34] %v32
    %s37 = scalar_lea.vmem [#allocation0], 16
    %v38 = vld [vmem:[%s37] sm:%s25]
    %s39 = sshll.u32 1, 1
    %s40 = ssub.s32 %s39, 1
    %s41 = smul.addr 1, 2
    %s42 = scalar_lea.vmem %s1, %s41
    %43 = vst [vmem:[%s42] sm:%s40] %v38
    %s44 = scalar_lea.vmem [#allocation0], 24
    %v45 = vld [vmem:[%s44] sm:%s25]
    %s46 = sshll.u32 1, 1
    %s47 = ssub.s32 %s46, 1
    %s48 = smul.addr 1, 3
    %s49 = scalar_lea.vmem %s1, %s48
    %50 = vst [vmem:[%s49] sm:%s47] %v45

// kernel: squeeze.7
$region0: #{squeeze.7}
  %s0 = inlined_call_operand.vmem [shape: f32[2,512], index: 0, kind: input, shape index: {}]
  %s1 = inlined_call_operand.vmem [shape: f32[2,16,32], index: 1, kind: output, shape index: {}]
  $region1: #{squeeze.7} parent=0
    #allocation0 [shape = 'u8[16384]{0}', space=vmem, size = 0x4000, scoped, tag = 'scoped mem for input reshape']
    %s3 = sshll.u32 1, 2
    %s4 = ssub.s32 %s3, 1
    %s5 = smul.addr 2, 3
    %s6 = scalar_lea.vmem %s0, %s5
    %v7 = vld [vmem:[%s6] sm:%s4]
    %s8 = scalar_lea.vmem [#allocation0], 24
    %9 = vst [vmem:[%s8] sm:%s4] %v7
    %s10 = smul.addr 2, 2
    %s11 = scalar_lea.vmem %s0, %s10
    %v12 = vld [vmem:[%s11] sm:%s4]
    %s13 = scalar_lea.vmem [#allocation0], 16
    %14 = vst [vmem:[%s13] sm:%s4] %v12
    %s15 = scalar_lea.vmem %s0, 2
    %v16 = vld [vmem:[%s15] sm:%s4]
    %s17 = scalar_lea.vmem [#allocation0], 8
    %18 = vst [vmem:[%s17] sm:%s4] %v16
    %v19 = vld [vmem:[%s0] sm:%s4]
    %20 = vst [vmem:[#allocation0] sm:%s4] %v19
    %v21 = vld [vmem:[#allocation0] sm:$0x3]
    %vm22 = vcmask 261120
    %23 = vst.msk [vmem:[%s1] ss:$16 sm:$0x3] %vm22, %v21
    %s24 = scalar_lea.vmem [#allocation0], 8
    %v25 = vld [vmem:[%s24] sm:$0x3]
    %vm26 = vcmask 261120
    %s27 = scalar_lea.vmem %s1, 4
    %28 = vst.msk [vmem:[%s27] ss:$16 sm:$0x3] %vm26, %v25
    %s29 = scalar_lea.vmem [#allocation0], 16
    %v30 = vld [vmem:[%s29] sm:$0x3]
    %vm31 = vcmask 261120
    %s32 = scalar_lea.vmem %s1, 8
    %33 = vst.msk [vmem:[%s32] ss:$16 sm:$0x3] %vm31, %v30
    %s34 = scalar_lea.vmem [#allocation0], 24
    %v35 = vld [vmem:[%s34] sm:$0x3]
    %vm36 = vcmask 261120
    %s37 = scalar_lea.vmem %s1, 12
    %38 = vst.msk [vmem:[%s37] ss:$16 sm:$0x3] %vm36, %v35
    %v39 = vld [vmem:[#allocation0] ss:$8 sm:$0xf]
    %s40 = scalar_lea.vmem [#allocation0], 4294967265
    %v41 = vld [vmem:[%s40] ss:$8 sm:$0xf0]
    %vm42 = vcmask 1047556
    %v43 = vsel %vm42, %v41, %v39
    %44 = vrot.lane.b32.xlu0 %v43, 96
    %v45 = vpop.permute.xlu0 %44
    %vm46 = vcmask 261120
    %s47 = scalar_lea.vmem %s1, 1
    %48 = vst.msk [vmem:[%s47] ss:$4 sm:$0xff] %vm46, %v45
    %v49 = vld [vmem:[#allocation0] ss:$8 sm:$0xf]
    %s50 = scalar_lea.vmem [#allocation0], 4294967265
    %v51 = vld [vmem:[%s50] ss:$8 sm:$0xf0]
    %vm52 = vcmask 1047556
    %v53 = vsel %vm52, %v51, %v49
    %54 = vrot.lane.b32.xlu0 %v53, 64
    %v55 = vpop.permute.xlu0 %54
    %vm56 = vcmask 261120
    %s57 = scalar_lea.vmem %s1, 2
    %58 = vst.msk [vmem:[%s57] ss:$4 sm:$0xff] %vm56, %v55
    %v59 = vld [vmem:[#allocation0] ss:$8 sm:$0xf]
    %s60 = scalar_lea.vmem [#allocation0], 4294967265
    %v61 = vld [vmem:[%s60] ss:$8 sm:$0xf0]
    %vm62 = vcmask 1047556
    %v63 = vsel %vm62, %v61, %v59
    %64 = vrot.lane.b32.xlu0 %v63, 32
    %v65 = vpop.permute.xlu0 %64
    %vm66 = vcmask 261120
    %s67 = scalar_lea.vmem %s1, 3
    %68 = vst.msk [vmem:[%s67] ss:$4 sm:$0xff] %vm66, %v65

// kernel: custom_feature_extractor_forward.1
$region0: #{custom_feature_extractor_forward.1}
  #allocation0 [shape = 'u32[]', space=smem, size = 0x4, offset = 0x4, fixed_abs, tag = 'smem constant byte address 0x4 - core index']
  #allocation1 [shape = 'u32[144,128]{1,0:T(1,128)}', space=vmem, size = 0x12000, scoped, tag = 'internal scratch']
  %s0 = inlined_call_operand.vmem [shape: u8[2,18,54], index: 0, kind: input, shape index: {}]
  %s1 = inlined_call_operand.vmem [shape: f32[18,54], index: 1, kind: input, shape index: {}]
  %s2 = inlined_call_operand.vmem [shape: bf16[3,54,512], index: 2, kind: input, shape index: {}]
  %s3 = inlined_call_operand.vmem [shape: f32[1,512], index: 3, kind: input, shape index: {}]
  %s4 = inlined_call_operand.vmem [shape: f32[2,1,512], index: 4, kind: output, shape index: {}]
  %s5 = sld [smem:[#allocation0]]
  $region30: #{custom_feature_extractor_forward.1} parent=0
    _
  %s7 = ssub.s32 1, %s5
  %s8 = scalar_select 0, %s7, %s5
  // Predicated region
  $region2: #{custom_feature_extractor_forward.1} parent=0 // pred_check
    _
  $region3: #{custom_feature_extractor_forward.1} parent=0 // pred_check_branch
    %10 = sbr.rel (0) target = $region5
  $region4: #{custom_feature_extractor_forward.1} parent=0 // pred_region
    _
  $region5: #{custom_feature_extractor_forward.1} parent=0 // pred_fallthru
    _
  // Predicated region
  $region6: #{custom_feature_extractor_forward.1} parent=0 // pred_check
    _
  $region7: #{custom_feature_extractor_forward.1} parent=0 // pred_check_branch
    %12 = sbr.rel (0) target = $region9
  $region8: #{custom_feature_extractor_forward.1} parent=0 // pred_region
    _
  $region9: #{custom_feature_extractor_forward.1} parent=0 // pred_fallthru
    _
  // Predicated region
  $region10: #{custom_feature_extractor_forward.1} parent=0 // pred_check
    _
  $region11: #{custom_feature_extractor_forward.1} parent=0 // pred_check_branch
    %14 = sbr.rel (0) target = $region13
  $region12: #{custom_feature_extractor_forward.1} parent=0 // pred_region
    _
  $region13: #{custom_feature_extractor_forward.1} parent=0 // pred_fallthru
    _
  // Predicated region
  $region14: #{custom_feature_extractor_forward.1} parent=0 // pred_check
    _
  $region15: #{custom_feature_extractor_forward.1} parent=0 // pred_check_branch
    %16 = sbr.rel (0) target = $region17
  $region16: #{custom_feature_extractor_forward.1} parent=0 // pred_region
    _
  $region17: #{custom_feature_extractor_forward.1} parent=0 // pred_fallthru
    _
  %p18 = scmp.eq.s32.totalorder 0, 0
  // Predicated region
  $region18: #{custom_feature_extractor_forward.1} parent=0 // pred_check
    %p19 = pneg %p18
  $region19: #{custom_feature_extractor_forward.1} parent=0 // pred_check_branch
    %21 = sbr.rel (%p19) target = $region21
  $region20: #{custom_feature_extractor_forward.1} parent=0 // pred_region
    %v22 = vlaneseq
    %vm23 = vcmp.ge.s32.totalorder %v22, 0
    %vm24 = vcmp.lt.s32.totalorder %v22, 512
    %vm25 = vmand %vm23, %vm24
    %26 = vst.msk [vmem:[%s4] sm:$0xf] %vm25, 0.0
    %27 = vst.msk [vmem:[%s4 + $0x4] sm:$0xf] %vm25, 0.0
  $region21: #{custom_feature_extractor_forward.1} parent=0 // pred_fallthru
    _
  %s28 = smul.u32 0, 16
  %s29 = sshra.s32 %s28, 3
  %s30 = sand.u32 %s28, 7
  %s31 = smul.addr %s29, 2
  %s32 = scalar_lea.vmem %s0, %s31
  %v33 = vld [vmem:[%s32] sm:$0x3]
  %v34 = vld [vmem:[%s32 + $0x2] sm:$0x3]
  %v35 = vld [vmem:[%s32 + $0x4] sm:$0x1]
  %v36 = vld [vmem:[%s32 + $0x6] sm:$0x3]
  %v37 = vld [vmem:[%s32 + $0x8] sm:$0x3]
  %v38 = vld [vmem:[%s32 + $0xa] sm:$0x1]
  %v39 = vunpack.c.0.s8 %v33
  %v40 = vunpack.c.0.s8 %v34
  %v41 = vunpack.c.0.s8 %v35
  %v42 = vunpack.c.0.s8 %v36
  %v43 = vunpack.c.0.s8 %v37
  %v44 = vunpack.c.0.s8 %v38
  %v45 = vand.u32 %v39, 255
  %v46 = vand.u32 %v40, 255
  %v47 = vand.u32 %v41, 255
  %v48 = vand.u32 %v42, 255
  %v49 = vand.u32 %v43, 255
  %v50 = vand.u32 %v44, 255
  %v51 = vcvt.s32.f32 %v45
  %v52 = vcvt.s32.f32 %v46
  %v53 = vcvt.s32.f32 %v47
  %v54 = vcvt.s32.f32 %v48
  %v55 = vcvt.s32.f32 %v49
  %v56 = vcvt.s32.f32 %v50
  %s57 = scalar_lea.vmem %s1, %s28
  %v58 = vld [vmem:[%s57] sm:$0xff]
  %v59 = vld [vmem:[%s57 + $0x8] sm:$0xff]
  %v60 = vld [vmem:[%s57 + $0x10] sm:$0x3]
  %v61 = vadd.f32 %v51, %v58
  %v62 = vadd.f32 %v52, %v59
  %v63 = vadd.f32 %v53, %v60
  %v64 = vadd.f32 %v54, %v58
  %v65 = vadd.f32 %v55, %v59
  %v66 = vadd.f32 %v56, %v60
  %v67 = vpack.c.bf16 %v62, %v61
  %v68 = vpack.c.bf16 %v63, %v63
  %v69 = vpack.c.bf16 %v65, %v64
  %v70 = vpack.c.bf16 %v66, %v66
  %vm71 = vsmask.f32 7424
  %v73 = vshrl.u32 %v67, 16
  %v75 = vshll.u32 %v67, 16
  %v77 = vrot.slane %v75, 1
  %v78 = vor.u32 %v73, %v77
  %v80 = vshll.u32 %v68, 16
  %v82 = vrot.slane %v80, 1
  %v83 = vsel %vm71, %v78, %v82
  %v85 = vshrl.u32 %v69, 16
  %v87 = vshll.u32 %v69, 16
  %v89 = vrot.slane %v87, 1
  %v90 = vor.u32 %v85, %v89
  %v92 = vshll.u32 %v70, 16
  %v94 = vrot.slane %v92, 1
  %v95 = vsel %vm71, %v90, %v94
  %vm100 = vcmask 1046528
  %v101 = vrot.slane %v67, 1
  %v102 = vrot.slane %v68, 1
  %v103 = vsel %vm100, %v101, %v102
  %v104 = vrot.slane %v69, 1
  %v105 = vrot.slane %v70, 1
  %v106 = vsel %vm100, %v104, %v105
  %v107 = vld [vmem:[%s2] sm:$0xff]
  %v108 = vld [vmem:[%s2 + $0x8] sm:$0xff]
  %v109 = vld [vmem:[%s2 + $0x10] sm:$0xff]
  %v110 = vld [vmem:[%s2 + $0x18] sm:$0xff]
  %v111 = vld [vmem:[%s2 + $0x20] sm:$0xff]
  %v112 = vld [vmem:[%s2 + $0x28] sm:$0xff]
  %v113 = vld [vmem:[%s2 + $0x30] sm:$0xff]
  %v114 = vld [vmem:[%s2 + $0x38] sm:$0xff]
  %v115 = vld [vmem:[%s2 + $0x40] sm:$0xff]
  %v116 = vld [vmem:[%s2 + $0x48] sm:$0xff]
  %v117 = vld [vmem:[%s2 + $0x50] sm:$0xff]
  %v118 = vld [vmem:[%s2 + $0x58] sm:$0xff]
  %v119 = vld [vmem:[%s2 + $0x60] sm:$0x77]
  %v120 = vld [vmem:[%s2 + $0x68] sm:$0x77]
  %s121 = scalar_lea.vmem %s2, 112
  %v122 = vld [vmem:[%s121] sm:$0xff]
  %v123 = vld [vmem:[%s121 + $0x8] sm:$0xff]
  %v124 = vld [vmem:[%s121 + $0x10] sm:$0xff]
  %v125 = vld [vmem:[%s121 + $0x18] sm:$0xff]
  %v126 = vld [vmem:[%s121 + $0x20] sm:$0xff]
  %v127 = vld [vmem:[%s121 + $0x28] sm:$0xff]
  %v128 = vld [vmem:[%s121 + $0x30] sm:$0xff]
  %v129 = vld [vmem:[%s121 + $0x38] sm:$0xff]
  %v130 = vld [vmem:[%s121 + $0x40] sm:$0xff]
  %v131 = vld [vmem:[%s121 + $0x48] sm:$0xff]
  %v132 = vld [vmem:[%s121 + $0x50] sm:$0xff]
  %v133 = vld [vmem:[%s121 + $0x58] sm:$0xff]
  %v134 = vld [vmem:[%s121 + $0x60] sm:$0x77]
  %v135 = vld [vmem:[%s121 + $0x68] sm:$0x77]
  %v150 = vunpack.c.l.b16 %v122
  %v151 = vunpack.c.h.b16 %v122
  %v152 = vunpack.c.l.b16 %v123
  %v153 = vunpack.c.h.b16 %v123
  %v154 = vunpack.c.l.b16 %v124
  %v155 = vunpack.c.h.b16 %v124
  %v156 = vunpack.c.l.b16 %v125
  %v157 = vunpack.c.h.b16 %v125
  %v158 = vunpack.c.l.b16 %v126
  %v159 = vunpack.c.h.b16 %v126
  %v160 = vunpack.c.l.b16 %v127
  %v161 = vunpack.c.h.b16 %v127
  %v162 = vunpack.c.l.b16 %v128
  %v163 = vunpack.c.h.b16 %v128
  %v164 = vunpack.c.l.b16 %v129
  %v165 = vunpack.c.h.b16 %v129
  %v166 = vunpack.c.l.b16 %v130
  %v167 = vunpack.c.h.b16 %v130
  %v168 = vunpack.c.l.b16 %v131
  %v169 = vunpack.c.h.b16 %v131
  %v170 = vunpack.c.l.b16 %v132
  %v171 = vunpack.c.h.b16 %v132
  %v172 = vunpack.c.l.b16 %v133
  %v173 = vunpack.c.h.b16 %v133
  %v174 = vunpack.c.l.b16 %v134
  %v175 = vunpack.c.h.b16 %v134
  %v176 = vunpack.c.l.b16 %v135
  %v177 = vunpack.c.h.b16 %v135
  %v178 = vpack.c.b16 %v154, %v150
  %v179 = vpack.c.b16 %v155, %v151
  %v180 = vpack.c.b16 %v156, %v152
  %v181 = vpack.c.b16 %v157, %v153
  %v182 = vpack.c.b16 %v162, %v158
  %v183 = vpack.c.b16 %v163, %v159
  %v184 = vpack.c.b16 %v164, %v160
  %v185 = vpack.c.b16 %v165, %v161
  %v186 = vpack.c.b16 %v170, %v166
  %v187 = vpack.c.b16 %v171, %v167
  %v188 = vpack.c.b16 %v172, %v168
  %v189 = vpack.c.b16 %v173, %v169
  %v190 = vpack.c.b16 %v174, %v174
  %v191 = vpack.c.b16 %v175, %v175
  %v192 = vpack.c.b16 %v176, %v176
  %v193 = vpack.c.b16 %v177, %v177
  %vm206 = vcmask 441344
  %v208 = vsel %vm206, %v83, 0
  %v211 = vsel %vm206, %v95, 0
  %vm213 = vcmask 1042432
  %v215 = vsel %vm213, %v190, 0
  %v218 = vsel %vm213, %v191, 0
  %v221 = vsel %vm213, %v192, 0
  %v224 = vsel %vm213, %v193, 0
  %226 = vmatprep.subr.bf16.mxu0 0
  %227 = vmatpush1.bf16.msra.mxu0 0
  %228 = vmatprep.subr.bf16.mxu0 0
  %229 = vmatpush1.bf16.msra.mxu0 0
  %230 = vmatprep.subr.bf16.mxu0 0
  %231 = vmatpush1.bf16.msra.mxu0 0
  %232 = vmatprep.subr.bf16.mxu0 0
  %233 = vmatpush1.bf16.msra.mxu0 0
  %234 = vmatprep.subr.bf16.mxu0 %v218
  %235 = vmatpush1.bf16.msra.mxu0 %v215
  %236 = vmatprep.subr.bf16.mxu0 %v187
  %237 = vmatpush1.bf16.msra.mxu0 %v186
  %238 = vmatprep.subr.bf16.mxu0 %v183
  %239 = vmatpush1.bf16.msra.mxu0 %v182
  %240 = vmatprep.subr.bf16.mxu0 %v179
  %241 = vmatpush1.bf16.msra.mxu0 %v178
  %242 = vmatprep.subr.bf16.mxu0 0
  %243 = vmatpush2.bf16.msra.mxu0 0
  %244 = vmatprep.subr.bf16.mxu0 0
  %245 = vmatpush2.bf16.msra.mxu0 0
  %246 = vmatprep.subr.bf16.mxu0 0
  %247 = vmatpush2.bf16.msra.mxu0 0
  %248 = vmatprep.subr.bf16.mxu0 0
  %249 = vmatpush2.bf16.msra.mxu0 0
  %250 = vmatprep.subr.bf16.mxu0 0
  %251 = vmatpush2.bf16.msra.mxu0 0
  %252 = vmatprep.subr.bf16.mxu0 0
  %253 = vmatpush2.bf16.msra.mxu0 0
  %254 = vmatprep.subr.bf16.mxu0 0
  %255 = vmatpush2.bf16.msra.mxu0 0
  %256 = vmatprep.subr.bf16.mxu0 0
  %257 = vmatpush2.bf16.msra.mxu0 0
  %258 = vmatprep.mubr.bf16.mxu0 0
  %259 = vmatmul.mubr.bf16.gmra.mxu0 %v208
  %v260 = vpop.f32.mrf.mxu0
  %v261 = vadd.f32 0.0, %v260
  %v262 = vpop.f32.mrf.mxu0
  %v263 = vadd.f32 0.0, %v262
  %v264 = vpop.f32.mrf.mxu0
  %v265 = vadd.f32 0.0, %v264
  %v266 = vpop.f32.mrf.mxu0
  %v267 = vadd.f32 0.0, %v266
  %268 = vmatprep.mubr.bf16.mxu0 0
  %269 = vmatmul.mubr.bf16.gmra.mxu0 %v211
  %v270 = vpop.f32.mrf.mxu0
  %v271 = vadd.f32 0.0, %v270
  %v272 = vpop.f32.mrf.mxu0
  %v273 = vadd.f32 0.0, %v272
  %v274 = vpop.f32.mrf.mxu0
  %v275 = vadd.f32 0.0, %v274
  %v276 = vpop.f32.mrf.mxu0
  %v277 = vadd.f32 0.0, %v276
  %278 = vdwg.mxu0
  %279 = vmatprep.subr.bf16.mxu0 0
  %280 = vmatpush1.bf16.msra.mxu0 0
  %281 = vmatprep.subr.bf16.mxu0 0
  %282 = vmatpush1.bf16.msra.mxu0 0
  %283 = vmatprep.subr.bf16.mxu0 0
  %284 = vmatpush1.bf16.msra.mxu0 0
  %285 = vmatprep.subr.bf16.mxu0 0
  %286 = vmatpush1.bf16.msra.mxu0 0
  %287 = vmatprep.subr.bf16.mxu0 %v224
  %288 = vmatpush1.bf16.msra.mxu0 %v221
  %289 = vmatprep.subr.bf16.mxu0 %v189
  %290 = vmatpush1.bf16.msra.mxu0 %v188
  %291 = vmatprep.subr.bf16.mxu0 %v185
  %292 = vmatpush1.bf16.msra.mxu0 %v184
  %293 = vmatprep.subr.bf16.mxu0 %v181
  %294 = vmatpush1.bf16.msra.mxu0 %v180
  %295 = vmatprep.subr.bf16.mxu0 0
  %296 = vmatpush2.bf16.msra.mxu0 0
  %297 = vmatprep.subr.bf16.mxu0 0
  %298 = vmatpush2.bf16.msra.mxu0 0
  %299 = vmatprep.subr.bf16.mxu0 0
  %300 = vmatpush2.bf16.msra.mxu0 0
  %301 = vmatprep.subr.bf16.mxu0 0
  %302 = vmatpush2.bf16.msra.mxu0 0
  %303 = vmatprep.subr.bf16.mxu0 0
  %304 = vmatpush2.bf16.msra.mxu0 0
  %305 = vmatprep.subr.bf16.mxu0 0
  %306 = vmatpush2.bf16.msra.mxu0 0
  %307 = vmatprep.subr.bf16.mxu0 0
  %308 = vmatpush2.bf16.msra.mxu0 0
  %309 = vmatprep.subr.bf16.mxu0 0
  %310 = vmatpush2.bf16.msra.mxu0 0
  %311 = vmatprep.mubr.bf16.mxu0 0
  %312 = vmatmul.mubr.bf16.gmra.mxu0 %v208
  %v313 = vpop.f32.mrf.mxu0
  %v314 = vadd.f32 0.0, %v313
  %v315 = vpop.f32.mrf.mxu0
  %v316 = vadd.f32 0.0, %v315
  %v317 = vpop.f32.mrf.mxu0
  %v318 = vadd.f32 0.0, %v317
  %v319 = vpop.f32.mrf.mxu0
  %v320 = vadd.f32 0.0, %v319
  %321 = vmatprep.mubr.bf16.mxu0 0
  %322 = vmatmul.mubr.bf16.gmra.mxu0 %v211
  %v323 = vpop.f32.mrf.mxu0
  %v324 = vadd.f32 0.0, %v323
  %v325 = vpop.f32.mrf.mxu0
  %v326 = vadd.f32 0.0, %v325
  %v327 = vpop.f32.mrf.mxu0
  %v328 = vadd.f32 0.0, %v327
  %v329 = vpop.f32.mrf.mxu0
  %v330 = vadd.f32 0.0, %v329
  %331 = vdwg.mxu0
  %v346 = vunpack.c.l.b16 %v107
  %v347 = vunpack.c.h.b16 %v107
  %v348 = vunpack.c.l.b16 %v108
  %v349 = vunpack.c.h.b16 %v108
  %v350 = vunpack.c.l.b16 %v109
  %v351 = vunpack.c.h.b16 %v109
  %v352 = vunpack.c.l.b16 %v110
  %v353 = vunpack.c.h.b16 %v110
  %v354 = vunpack.c.l.b16 %v111
  %v355 = vunpack.c.h.b16 %v111
  %v356 = vunpack.c.l.b16 %v112
  %v357 = vunpack.c.h.b16 %v112
  %v358 = vunpack.c.l.b16 %v113
  %v359 = vunpack.c.h.b16 %v113
  %v360 = vunpack.c.l.b16 %v114
  %v361 = vunpack.c.h.b16 %v114
  %v362 = vunpack.c.l.b16 %v115
  %v363 = vunpack.c.h.b16 %v115
  %v364 = vunpack.c.l.b16 %v116
  %v365 = vunpack.c.h.b16 %v116
  %v366 = vunpack.c.l.b16 %v117
  %v367 = vunpack.c.h.b16 %v117
  %v368 = vunpack.c.l.b16 %v118
  %v369 = vunpack.c.h.b16 %v118
  %v370 = vunpack.c.l.b16 %v119
  %v371 = vunpack.c.h.b16 %v119
  %v372 = vunpack.c.l.b16 %v120
  %v373 = vunpack.c.h.b16 %v120
  %v374 = vpack.c.b16 %v350, %v346
  %v375 = vpack.c.b16 %v351, %v347
  %v376 = vpack.c.b16 %v352, %v348
  %v377 = vpack.c.b16 %v353, %v349
  %v378 = vpack.c.b16 %v358, %v354
  %v379 = vpack.c.b16 %v359, %v355
  %v380 = vpack.c.b16 %v360, %v356
  %v381 = vpack.c.b16 %v361, %v357
  %v382 = vpack.c.b16 %v366, %v362
  %v383 = vpack.c.b16 %v367, %v363
  %v384 = vpack.c.b16 %v368, %v364
  %v385 = vpack.c.b16 %v369, %v365
  %v386 = vpack.c.b16 %v370, %v370
  %v387 = vpack.c.b16 %v371, %v371
  %v388 = vpack.c.b16 %v372, %v372
  %v389 = vpack.c.b16 %v373, %v373
  %v402 = vsel %vm206, %v67, 0
  %v404 = vsel %vm206, %v69, 0
  %v407 = vsel %vm213, %v386, 0
  %v410 = vsel %vm213, %v387, 0
  %v413 = vsel %vm213, %v388, 0
  %v416 = vsel %vm213, %v389, 0
  %418 = vmatprep.subr.bf16.mxu0 0
  %419 = vmatpush1.bf16.msra.mxu0 0
  %420 = vmatprep.subr.bf16.mxu0 0
  %421 = vmatpush1.bf16.msra.mxu0 0
  %422 = vmatprep.subr.bf16.mxu0 0
  %423 = vmatpush1.bf16.msra.mxu0 0
  %424 = vmatprep.subr.bf16.mxu0 0
  %425 = vmatpush1.bf16.msra.mxu0 0
  %426 = vmatprep.subr.bf16.mxu0 %v410
  %427 = vmatpush1.bf16.msra.mxu0 %v407
  %428 = vmatprep.subr.bf16.mxu0 %v383
  %429 = vmatpush1.bf16.msra.mxu0 %v382
  %430 = vmatprep.subr.bf16.mxu0 %v379
  %431 = vmatpush1.bf16.msra.mxu0 %v378
  %432 = vmatprep.subr.bf16.mxu0 %v375
  %433 = vmatpush1.bf16.msra.mxu0 %v374
  %434 = vmatprep.subr.bf16.mxu0 0
  %435 = vmatpush2.bf16.msra.mxu0 0
  %436 = vmatprep.subr.bf16.mxu0 0
  %437 = vmatpush2.bf16.msra.mxu0 0
  %438 = vmatprep.subr.bf16.mxu0 0
  %439 = vmatpush2.bf16.msra.mxu0 0
  %440 = vmatprep.subr.bf16.mxu0 0
  %441 = vmatpush2.bf16.msra.mxu0 0
  %442 = vmatprep.subr.bf16.mxu0 0
  %443 = vmatpush2.bf16.msra.mxu0 0
  %444 = vmatprep.subr.bf16.mxu0 0
  %445 = vmatpush2.bf16.msra.mxu0 0
  %446 = vmatprep.subr.bf16.mxu0 0
  %447 = vmatpush2.bf16.msra.mxu0 0
  %448 = vmatprep.subr.bf16.mxu0 0
  %449 = vmatpush2.bf16.msra.mxu0 0
  %450 = vmatprep.mubr.bf16.mxu0 0
  %451 = vmatmul.mubr.bf16.gmra.mxu0 %v402
  %v452 = vpop.f32.mrf.mxu0
  %v453 = vadd.f32 %v261, %v452
  %v454 = vpop.f32.mrf.mxu0
  %v455 = vadd.f32 %v263, %v454
  %v456 = vpop.f32.mrf.mxu0
  %v457 = vadd.f32 %v265, %v456
  %v458 = vpop.f32.mrf.mxu0
  %v459 = vadd.f32 %v267, %v458
  %460 = vmatprep.mubr.bf16.mxu0 0
  %461 = vmatmul.mubr.bf16.gmra.mxu0 %v404
  %v462 = vpop.f32.mrf.mxu0
  %v463 = vadd.f32 %v271, %v462
  %v464 = vpop.f32.mrf.mxu0
  %v465 = vadd.f32 %v273, %v464
  %v466 = vpop.f32.mrf.mxu0
  %v467 = vadd.f32 %v275, %v466
  %v468 = vpop.f32.mrf.mxu0
  %v469 = vadd.f32 %v277, %v468
  %470 = vdwg.mxu0
  %471 = vmatprep.subr.bf16.mxu0 0
  %472 = vmatpush1.bf16.msra.mxu0 0
  %473 = vmatprep.subr.bf16.mxu0 0
  %474 = vmatpush1.bf16.msra.mxu0 0
  %475 = vmatprep.subr.bf16.mxu0 0
  %476 = vmatpush1.bf16.msra.mxu0 0
  %477 = vmatprep.subr.bf16.mxu0 0
  %478 = vmatpush1.bf16.msra.mxu0 0
  %479 = vmatprep.subr.bf16.mxu0 %v416
  %480 = vmatpush1.bf16.msra.mxu0 %v413
  %481 = vmatprep.subr.bf16.mxu0 %v385
  %482 = vmatpush1.bf16.msra.mxu0 %v384
  %483 = vmatprep.subr.bf16.mxu0 %v381
  %484 = vmatpush1.bf16.msra.mxu0 %v380
  %485 = vmatprep.subr.bf16.mxu0 %v377
  %486 = vmatpush1.bf16.msra.mxu0 %v376
  %487 = vmatprep.subr.bf16.mxu0 0
  %488 = vmatpush2.bf16.msra.mxu0 0
  %489 = vmatprep.subr.bf16.mxu0 0
  %490 = vmatpush2.bf16.msra.mxu0 0
  %491 = vmatprep.subr.bf16.mxu0 0
  %492 = vmatpush2.bf16.msra.mxu0 0
  %493 = vmatprep.subr.bf16.mxu0 0
  %494 = vmatpush2.bf16.msra.mxu0 0
  %495 = vmatprep.subr.bf16.mxu0 0
  %496 = vmatpush2.bf16.msra.mxu0 0
  %497 = vmatprep.subr.bf16.mxu0 0
  %498 = vmatpush2.bf16.msra.mxu0 0
  %499 = vmatprep.subr.bf16.mxu0 0
  %500 = vmatpush2.bf16.msra.mxu0 0
  %501 = vmatprep.subr.bf16.mxu0 0
  %502 = vmatpush2.bf16.msra.mxu0 0
  %503 = vmatprep.mubr.bf16.mxu0 0
  %504 = vmatmul.mubr.bf16.gmra.mxu0 %v402
  %v505 = vpop.f32.mrf.mxu0
  %v506 = vadd.f32 %v314, %v505
  %v507 = vpop.f32.mrf.mxu0
  %v508 = vadd.f32 %v316, %v507
  %v509 = vpop.f32.mrf.mxu0
  %v510 = vadd.f32 %v318, %v509
  %v511 = vpop.f32.mrf.mxu0
  %v512 = vadd.f32 %v320, %v511
  %513 = vmatprep.mubr.bf16.mxu0 0
  %514 = vmatmul.mubr.bf16.gmra.mxu0 %v404
  %v515 = vpop.f32.mrf.mxu0
  %v516 = vadd.f32 %v324, %v515
  %v517 = vpop.f32.mrf.mxu0
  %v518 = vadd.f32 %v326, %v517
  %v519 = vpop.f32.mrf.mxu0
  %v520 = vadd.f32 %v328, %v519
  %v521 = vpop.f32.mrf.mxu0
  %v522 = vadd.f32 %v330, %v521
  %523 = vdwg.mxu0
  %s524 = scalar_lea.vmem %s2, 224
  %v525 = vld [vmem:[%s524] sm:$0xff]
  %v526 = vld [vmem:[%s524 + $0x8] sm:$0xff]
  %v527 = vld [vmem:[%s524 + $0x10] sm:$0xff]
  %v528 = vld [vmem:[%s524 + $0x18] sm:$0xff]
  %v529 = vld [vmem:[%s524 + $0x20] sm:$0xff]
  %v530 = vld [vmem:[%s524 + $0x28] sm:$0xff]
  %v531 = vld [vmem:[%s524 + $0x30] sm:$0xff]
  %v532 = vld [vmem:[%s524 + $0x38] sm:$0xff]
  %v533 = vld [vmem:[%s524 + $0x40] sm:$0xff]
  %v534 = vld [vmem:[%s524 + $0x48] sm:$0xff]
  %v535 = vld [vmem:[%s524 + $0x50] sm:$0xff]
  %v536 = vld [vmem:[%s524 + $0x58] sm:$0xff]
  %v537 = vld [vmem:[%s524 + $0x60] sm:$0x77]
  %v538 = vld [vmem:[%s524 + $0x68] sm:$0x77]
  %v553 = vunpack.c.l.b16 %v525
  %v554 = vunpack.c.h.b16 %v525
  %v555 = vunpack.c.l.b16 %v526
  %v556 = vunpack.c.h.b16 %v526
  %v557 = vunpack.c.l.b16 %v527
  %v558 = vunpack.c.h.b16 %v527
  %v559 = vunpack.c.l.b16 %v528
  %v560 = vunpack.c.h.b16 %v528
  %v561 = vunpack.c.l.b16 %v529
  %v562 = vunpack.c.h.b16 %v529
  %v563 = vunpack.c.l.b16 %v530
  %v564 = vunpack.c.h.b16 %v530
  %v565 = vunpack.c.l.b16 %v531
  %v566 = vunpack.c.h.b16 %v531
  %v567 = vunpack.c.l.b16 %v532
  %v568 = vunpack.c.h.b16 %v532
  %v569 = vunpack.c.l.b16 %v533
  %v570 = vunpack.c.h.b16 %v533
  %v571 = vunpack.c.l.b16 %v534
  %v572 = vunpack.c.h.b16 %v534
  %v573 = vunpack.c.l.b16 %v535
  %v574 = vunpack.c.h.b16 %v535
  %v575 = vunpack.c.l.b16 %v536
  %v576 = vunpack.c.h.b16 %v536
  %v577 = vunpack.c.l.b16 %v537
  %v578 = vunpack.c.h.b16 %v537
  %v579 = vunpack.c.l.b16 %v538
  %v580 = vunpack.c.h.b16 %v538
  %v581 = vpack.c.b16 %v557, %v553
  %v582 = vpack.c.b16 %v558, %v554
  %v583 = vpack.c.b16 %v559, %v555
  %v584 = vpack.c.b16 %v560, %v556
  %v585 = vpack.c.b16 %v565, %v561
  %v586 = vpack.c.b16 %v566, %v562
  %v587 = vpack.c.b16 %v567, %v563
  %v588 = vpack.c.b16 %v568, %v564
  %v589 = vpack.c.b16 %v573, %v569
  %v590 = vpack.c.b16 %v574, %v570
  %v591 = vpack.c.b16 %v575, %v571
  %v592 = vpack.c.b16 %v576, %v572
  %v593 = vpack.c.b16 %v577, %v577
  %v594 = vpack.c.b16 %v578, %v578
  %v595 = vpack.c.b16 %v579, %v579
  %v596 = vpack.c.b16 %v580, %v580
  %v610 = vsel %vm206, %v103, 0
  %v613 = vsel %vm206, %v106, 0
  %v616 = vsel %vm213, %v593, 0
  %v619 = vsel %vm213, %v594, 0
  %v622 = vsel %vm213, %v595, 0
  %v625 = vsel %vm213, %v596, 0
  %627 = vmatprep.subr.bf16.mxu0 0
  %628 = vmatpush1.bf16.msra.mxu0 0
  %629 = vmatprep.subr.bf16.mxu0 0
  %630 = vmatpush1.bf16.msra.mxu0 0
  %631 = vmatprep.subr.bf16.mxu0 0
  %632 = vmatpush1.bf16.msra.mxu0 0
  %633 = vmatprep.subr.bf16.mxu0 0
  %634 = vmatpush1.bf16.msra.mxu0 0
  %635 = vmatprep.subr.bf16.mxu0 %v619
  %636 = vmatpush1.bf16.msra.mxu0 %v616
  %637 = vmatprep.subr.bf16.mxu0 %v590
  %638 = vmatpush1.bf16.msra.mxu0 %v589
  %639 = vmatprep.subr.bf16.mxu0 %v586
  %640 = vmatpush1.bf16.msra.mxu0 %v585
  %641 = vmatprep.subr.bf16.mxu0 %v582
  %642 = vmatpush1.bf16.msra.mxu0 %v581
  %643 = vmatprep.subr.bf16.mxu0 0
  %644 = vmatpush2.bf16.msra.mxu0 0
  %645 = vmatprep.subr.bf16.mxu0 0
  %646 = vmatpush2.bf16.msra.mxu0 0
  %647 = vmatprep.subr.bf16.mxu0 0
  %648 = vmatpush2.bf16.msra.mxu0 0
  %649 = vmatprep.subr.bf16.mxu0 0
  %650 = vmatpush2.bf16.msra.mxu0 0
  %651 = vmatprep.subr.bf16.mxu0 0
  %652 = vmatpush2.bf16.msra.mxu0 0
  %653 = vmatprep.subr.bf16.mxu0 0
  %654 = vmatpush2.bf16.msra.mxu0 0
  %655 = vmatprep.subr.bf16.mxu0 0
  %656 = vmatpush2.bf16.msra.mxu0 0
  %657 = vmatprep.subr.bf16.mxu0 0
  %658 = vmatpush2.bf16.msra.mxu0 0
  %659 = vmatprep.mubr.bf16.mxu0 0
  %660 = vmatmul.mubr.bf16.gmra.mxu0 %v610
  %v661 = vpop.f32.mrf.mxu0
  %v662 = vadd.f32 0.0, %v661
  %v663 = vpop.f32.mrf.mxu0
  %v664 = vadd.f32 0.0, %v663
  %v665 = vpop.f32.mrf.mxu0
  %v666 = vadd.f32 0.0, %v665
  %v667 = vpop.f32.mrf.mxu0
  %v668 = vadd.f32 0.0, %v667
  %669 = vmatprep.mubr.bf16.mxu0 0
  %670 = vmatmul.mubr.bf16.gmra.mxu0 %v613
  %v671 = vpop.f32.mrf.mxu0
  %v672 = vadd.f32 0.0, %v671
  %v673 = vpop.f32.mrf.mxu0
  %v674 = vadd.f32 0.0, %v673
  %v675 = vpop.f32.mrf.mxu0
  %v676 = vadd.f32 0.0, %v675
  %v677 = vpop.f32.mrf.mxu0
  %v678 = vadd.f32 0.0, %v677
  %679 = vdwg.mxu0
  %680 = vmatprep.subr.bf16.mxu0 0
  %681 = vmatpush1.bf16.msra.mxu0 0
  %682 = vmatprep.subr.bf16.mxu0 0
  %683 = vmatpush1.bf16.msra.mxu0 0
  %684 = vmatprep.subr.bf16.mxu0 0
  %685 = vmatpush1.bf16.msra.mxu0 0
  %686 = vmatprep.subr.bf16.mxu0 0
  %687 = vmatpush1.bf16.msra.mxu0 0
  %688 = vmatprep.subr.bf16.mxu0 %v625
  %689 = vmatpush1.bf16.msra.mxu0 %v622
  %690 = vmatprep.subr.bf16.mxu0 %v592
  %691 = vmatpush1.bf16.msra.mxu0 %v591
  %692 = vmatprep.subr.bf16.mxu0 %v588
  %693 = vmatpush1.bf16.msra.mxu0 %v587
  %694 = vmatprep.subr.bf16.mxu0 %v584
  %695 = vmatpush1.bf16.msra.mxu0 %v583
  %696 = vmatprep.subr.bf16.mxu0 0
  %697 = vmatpush2.bf16.msra.mxu0 0
  %698 = vmatprep.subr.bf16.mxu0 0
  %699 = vmatpush2.bf16.msra.mxu0 0
  %700 = vmatprep.subr.bf16.mxu0 0
  %701 = vmatpush2.bf16.msra.mxu0 0
  %702 = vmatprep.subr.bf16.mxu0 0
  %703 = vmatpush2.bf16.msra.mxu0 0
  %704 = vmatprep.subr.bf16.mxu0 0
  %705 = vmatpush2.bf16.msra.mxu0 0
  %706 = vmatprep.subr.bf16.mxu0 0
  %707 = vmatpush2.bf16.msra.mxu0 0
  %708 = vmatprep.subr.bf16.mxu0 0
  %709 = vmatpush2.bf16.msra.mxu0 0
  %710 = vmatprep.subr.bf16.mxu0 0
  %711 = vmatpush2.bf16.msra.mxu0 0
  %712 = vmatprep.mubr.bf16.mxu0 0
  %713 = vmatmul.mubr.bf16.gmra.mxu0 %v610
  %v714 = vpop.f32.mrf.mxu0
  %v715 = vadd.f32 0.0, %v714
  %v716 = vpop.f32.mrf.mxu0
  %v717 = vadd.f32 0.0, %v716
  %v718 = vpop.f32.mrf.mxu0
  %v719 = vadd.f32 0.0, %v718
  %v720 = vpop.f32.mrf.mxu0
  %v721 = vadd.f32 0.0, %v720
  %722 = vmatprep.mubr.bf16.mxu0 0
  %723 = vmatmul.mubr.bf16.gmra.mxu0 %v613
  %v724 = vpop.f32.mrf.mxu0
  %v725 = vadd.f32 0.0, %v724
  %v726 = vpop.f32.mrf.mxu0
  %v727 = vadd.f32 0.0, %v726
  %v728 = vpop.f32.mrf.mxu0
  %v729 = vadd.f32 0.0, %v728
  %v730 = vpop.f32.mrf.mxu0
  %v731 = vadd.f32 0.0, %v730
  %732 = vdwg.mxu0
  %v733 = vadd.f32 %v453, %v662
  %v734 = vadd.f32 %v455, %v664
  %v735 = vadd.f32 %v506, %v715
  %v736 = vadd.f32 %v508, %v717
  %v737 = vadd.f32 %v457, %v666
  %v738 = vadd.f32 %v459, %v668
  %v739 = vadd.f32 %v510, %v719
  %v740 = vadd.f32 %v512, %v721
  %v741 = vadd.f32 %v463, %v672
  %v742 = vadd.f32 %v465, %v674
  %v743 = vadd.f32 %v516, %v725
  %v744 = vadd.f32 %v518, %v727
  %v745 = vadd.f32 %v467, %v676
  %v746 = vadd.f32 %v469, %v678
  %v747 = vadd.f32 %v520, %v729
  %v748 = vadd.f32 %v522, %v731
  %v749 = vld [vmem:[%s3] sm:$0xf]
  %v751 = vlaneseq
  %v752 = vshrl.u32 %v751, 7
  %v753 = vsub.s32 0, %v752
  %v754 = vrot.slane %v749, %v753
  %v755 = vlaneseq
  %v756 = vshrl.u32 %v755, 7
  %v757 = vsub.s32 1, %v756
  %v758 = vrot.slane %v749, %v757
  %v759 = vlaneseq
  %v760 = vshrl.u32 %v759, 7
  %v761 = vsub.s32 2, %v760
  %v762 = vrot.slane %v749, %v761
  %v763 = vlaneseq
  %v764 = vshrl.u32 %v763, 7
  %v765 = vsub.s32 3, %v764
  %v766 = vrot.slane %v749, %v765
  %v771 = vadd.f32 %v733, %v754
  %v772 = vadd.f32 %v734, %v758
  %v773 = vadd.f32 %v735, %v762
  %v774 = vadd.f32 %v736, %v766
  %v775 = vadd.f32 %v737, %v754
  %v776 = vadd.f32 %v738, %v758
  %v777 = vadd.f32 %v739, %v762
  %v778 = vadd.f32 %v740, %v766
  %v779 = vadd.f32 %v741, %v754
  %v780 = vadd.f32 %v742, %v758
  %v781 = vadd.f32 %v743, %v762
  %v782 = vadd.f32 %v744, %v766
  %v783 = vadd.f32 %v745, %v754
  %v784 = vadd.f32 %v746, %v758
  %v785 = vadd.f32 %v747, %v762
  %v786 = vadd.f32 %v748, %v766
  %v787 = vmax.f32 %v771, 0.0
  %v788 = vmax.f32 %v772, 0.0
  %v789 = vmax.f32 %v773, 0.0
  %v790 = vmax.f32 %v774, 0.0
  %v791 = vmax.f32 %v775, 0.0
  %v792 = vmax.f32 %v776, 0.0
  %v793 = vmax.f32 %v777, 0.0
  %v794 = vmax.f32 %v778, 0.0
  %v795 = vmax.f32 %v779, 0.0
  %v796 = vmax.f32 %v780, 0.0
  %v797 = vmax.f32 %v781, 0.0
  %v798 = vmax.f32 %v782, 0.0
  %v799 = vmax.f32 %v783, 0.0
  %v800 = vmax.f32 %v784, 0.0
  %v801 = vmax.f32 %v785, 0.0
  %v802 = vmax.f32 %v786, 0.0
  %v803 = vld [vmem:[%s4] sm:$0xf]
  %v804 = vadd.f32 %v787, %v791
  %v805 = vrot.slane %v804, 4
  %v806 = vadd.f32 %v804, %v805
  %v807 = vrot.slane %v806, 2
  %v808 = vadd.f32 %v806, %v807
  %v809 = vrot.slane %v808, 1
  %v810 = vadd.f32 %v808, %v809
  %v811 = vadd.f32 %v788, %v792
  %v812 = vrot.slane %v811, 4
  %v813 = vadd.f32 %v811, %v812
  %v814 = vrot.slane %v813, 2
  %v815 = vadd.f32 %v813, %v814
  %v816 = vrot.slane %v815, 1
  %v817 = vadd.f32 %v815, %v816
  %v818 = vadd.f32 %v789, %v793
  %v819 = vrot.slane %v818, 4
  %v820 = vadd.f32 %v818, %v819
  %v821 = vrot.slane %v820, 2
  %v822 = vadd.f32 %v820, %v821
  %v823 = vrot.slane %v822, 1
  %v824 = vadd.f32 %v822, %v823
  %v825 = vadd.f32 %v790, %v794
  %v826 = vrot.slane %v825, 4
  %v827 = vadd.f32 %v825, %v826
  %v828 = vrot.slane %v827, 2
  %v829 = vadd.f32 %v827, %v828
  %v830 = vrot.slane %v829, 1
  %v831 = vadd.f32 %v829, %v830
  %v832 = vmul.f32 %v810, 0.00390625
  %v833 = vmul.f32 %v817, 0.00390625
  %v834 = vmul.f32 %v824, 0.00390625
  %v835 = vmul.f32 %v831, 0.00390625
  %v840 = vcombine.low %v832, %v833
  %v841 = vcombine.low %v834, %v835
  %v843 = vunpack.c.l.s4 1966171168
  %v844 = vunpack.c.0.s8 %v843
  %v845 = vlaneseq
  %v846 = vshrl.u32 %v845, 7
  %v847 = vsub.s32 %v844, %v846
  %v848 = vrot.slane %v840, %v847
  %v850 = vunpack.c.l.s4 1966171168
  %v851 = vunpack.c.0.s8 %v850
  %v852 = vlaneseq
  %v853 = vshrl.u32 %v852, 7
  %v854 = vsub.s32 %v851, %v853
  %v855 = vrot.slane %v841, %v854
  %v856 = vcombine.low %v848, %v855
  %v858 = vunpack.c.l.s4 1966171168
  %v859 = vunpack.c.0.s8 %v858
  %v860 = vlaneseq
  %v861 = vshrl.u32 %v860, 7
  %v862 = vsub.s32 %v859, %v861
  %v863 = vrot.slane %v856, %v862
  %v865 = vadd.f32 %v803, %v863
  %v866 = vlaneseq
  %vm867 = vcmp.ge.s32.totalorder %v866, 0
  %vm868 = vcmp.lt.s32.totalorder %v866, 512
  %vm869 = vmand %vm867, %vm868
  %870 = vst.msk [vmem:[%s4] sm:$0xf] %vm869, %v865
  %s871 = scalar_lea.vmem %s4, 4
  %v872 = vld [vmem:[%s871] sm:$0xf]
  %v873 = vadd.f32 %v795, %v799
  %v874 = vrot.slane %v873, 4
  %v875 = vadd.f32 %v873, %v874
  %v876 = vrot.slane %v875, 2
  %v877 = vadd.f32 %v875, %v876
  %v878 = vrot.slane %v877, 1
  %v879 = vadd.f32 %v877, %v878
  %v880 = vadd.f32 %v796, %v800
  %v881 = vrot.slane %v880, 4
  %v882 = vadd.f32 %v880, %v881
  %v883 = vrot.slane %v882, 2
  %v884 = vadd.f32 %v882, %v883
  %v885 = vrot.slane %v884, 1
  %v886 = vadd.f32 %v884, %v885
  %v887 = vadd.f32 %v797, %v801
  %v888 = vrot.slane %v887, 4
  %v889 = vadd.f32 %v887, %v888
  %v890 = vrot.slane %v889, 2
  %v891 = vadd.f32 %v889, %v890
  %v892 = vrot.slane %v891, 1
  %v893 = vadd.f32 %v891, %v892
  %v894 = vadd.f32 %v798, %v802
  %v895 = vrot.slane %v894, 4
  %v896 = vadd.f32 %v894, %v895
  %v897 = vrot.slane %v896, 2
  %v898 = vadd.f32 %v896, %v897
  %v899 = vrot.slane %v898, 1
  %v900 = vadd.f32 %v898, %v899
  %v901 = vmul.f32 %v879, 0.00390625
  %v902 = vmul.f32 %v886, 0.00390625
  %v903 = vmul.f32 %v893, 0.00390625
  %v904 = vmul.f32 %v900, 0.00390625
  %v909 = vcombine.low %v901, %v902
  %v910 = vcombine.low %v903, %v904
  %v912 = vunpack.c.l.s4 1966171168
  %v913 = vunpack.c.0.s8 %v912
  %v914 = vlaneseq
  %v915 = vshrl.u32 %v914, 7
  %v916 = vsub.s32 %v913, %v915
  %v917 = vrot.slane %v909, %v916
  %v919 = vunpack.c.l.s4 1966171168
  %v920 = vunpack.c.0.s8 %v919
  %v921 = vlaneseq
  %v922 = vshrl.u32 %v921, 7
  %v923 = vsub.s32 %v920, %v922
  %v924 = vrot.slane %v910, %v923
  %v925 = vcombine.low %v917, %v924
  %v927 = vunpack.c.l.s4 1966171168
  %v928 = vunpack.c.0.s8 %v927
  %v929 = vlaneseq
  %v930 = vshrl.u32 %v929, 7
  %v931 = vsub.s32 %v928, %v930
  %v932 = vrot.slane %v925, %v931
  %v934 = vadd.f32 %v872, %v932
  %935 = vst.msk [vmem:[%s871] sm:$0xf] %vm869, %v934
  // Predicated region
  $region22: #{custom_feature_extractor_forward.1} parent=0 // pred_check
    _
  $region23: #{custom_feature_extractor_forward.1} parent=0 // pred_check_branch
    %937 = sbr.rel (0) target = $region25
  $region24: #{custom_feature_extractor_forward.1} parent=0 // pred_region
    _
  $region25: #{custom_feature_extractor_forward.1} parent=0 // pred_fallthru
    _
  // Predicated region
  $region26: #{custom_feature_extractor_forward.1} parent=0 // pred_check
    _
  $region27: #{custom_feature_extractor_forward.1} parent=0 // pred_check_branch
    %939 = sbr.rel (0) target = $region29
  $region28: #{custom_feature_extractor_forward.1} parent=0 // pred_region
    _
  $region29: #{custom_feature_extractor_forward.1} parent=0 // pred_fallthru
    _

</llo_original>
